<compile_context>
chip_gen: v7x
topology: tpu7x:2x2x1
jax: 0.10.0
libtpu: 0.0.40
codegen_flags: <defaults>
</compile_context>

<pallas_src>
import jax
import jax.numpy as jnp
import numpy as np
from jax.experimental import pallas as pl
from jax.experimental.pallas import tpu as pltpu


# ---------------------------------------------------------------------------
# Setup (the module's __init__): dense exact-PPR matrix from an adjacency.
# ---------------------------------------------------------------------------
def calc_ppr_exact_dense(adj: jnp.ndarray, alpha: float) -> jnp.ndarray:
    """alpha * (I - (1-alpha) * D^{-1/2} (A + I) D^{-1/2})^{-1}, dense version."""
    n = adj.shape[0]
    A = adj + jnp.eye(n, dtype=adj.dtype)
    d = jnp.sum(A, axis=1)
    d_invsqrt = 1.0 / jnp.sqrt(d)
    M = d_invsqrt[:, None] * A * d_invsqrt[None, :]
    A_inner = jnp.eye(n, dtype=adj.dtype) - (1.0 - alpha) * M
    # TODO(synk): the dense matrix inverse is __init__-time setup; kept in plain JAX (not a hot path).
    return alpha * jnp.linalg.inv(A_inner)


# ---------------------------------------------------------------------------
# Pallas kernels: batch-blocked (gathered-rows) matmul   out = mat[idx] @ pred
# ---------------------------------------------------------------------------
def _ppr_matmul_resident_kernel(mat_ref, pred_ref, out_ref):
    # Single K block: the whole node axis is VMEM-resident, so write the dot straight to out
    # (no accumulator scratch, no init/finalize passes).
    out_ref[...] = jnp.dot(
        mat_ref[...], pred_ref[...], preferred_element_type=jnp.float32
    ).astype(out_ref.dtype)


def _ppr_matmul_tiled_kernel(mat_ref, pred_ref, out_ref, acc_ref):
    k = pl.program_id(1)

    @pl.when(k == 0)
    def _init():
        acc_ref[...] = jnp.zeros_like(acc_ref)

    # [TM, TK] (bf16) @ [TK, C] (bf16) -> fp32 on the MXU.
    acc_ref[...] += jnp.dot(
        mat_ref[...], pred_ref[...], preferred_element_type=jnp.float32
    )

    @pl.when(k == pl.num_programs(1) - 1)
    def _finalize():
        out_ref[...] = acc_ref[...].astype(out_ref.dtype)


# ---------------------------------------------------------------------------
# Wrapper: tiling decisions + padding + pallas_call
# ---------------------------------------------------------------------------
def _round_up(x: int, m: int) -> int:
    return ((x + m - 1) // m) * m


def _vmem_capacity_bytes() -> int:
    """Per-TensorCore VMEM capacity (64 MiB on v7x, 128 MiB on v5e/v6e); conservative fallback."""
    try:
        cap = getattr(pltpu.get_tpu_info(), "vmem_capacity_bytes", None)
        if cap:
            return int(cap)
    except Exception:
        pass
    return 64 * 1024 * 1024  # v7x-safe default


def _pick_tm(n_sel: int) -> int:
    if n_sel <= 8:
        return n_sel  # full-dim block is always legal
    # >= 2 batch blocks when possible (keeps both v7x TensorCores busy), capped at 256,
    # rounded to a multiple of 16 for bf16 sublane packing.
    return min(256, _round_up(-(-n_sel // 2), 16))


def _pick_tk(tm: int, n_nodes: int, n_cls: int, budget: int) -> int:
    # Resident cost: double-buffered bf16 mat tiles + double-buffered bf16 predictions
    # (constant block index still allocates 2 buffers by default) + f32 out tiles.
    resident = 4 * tm * n_nodes + 4 * n_nodes * n_cls + 8 * tm * n_cls
    if resident <= budget:
        return n_nodes
    per_tk = 4 * tm + 4 * n_cls        # bytes per unit of TK: 2x(tm*2B) mat + 2x(n_cls*2B) pred
    fixed = 12 * tm * n_cls            # f32 accumulator + 2x f32 out tiles
    tk = (budget - fixed) // per_tk
    return max(512, min(8192, (tk // 128) * 128))


def ppr_exact_forward(ppr_mat: jnp.ndarray,
                      predictions: jnp.ndarray,
                      idx: jnp.ndarray,
                      *,
                      force_block_k: int | None = None) -> jnp.ndarray:
    """Pallas implementation of PPRExact.forward (drop_prob=None -> dropout is identity)."""
    n_nodes = ppr_mat.shape[0]
    n_cls = predictions.shape[1]
    n_sel = idx.shape[0]

    if n_sel == 0:
        return jnp.zeros((0, n_cls), jnp.float32)

    # Streams are bf16 (memory-bound kernel); fp32 accumulation on the MXU.
    # NOTE: bf16 vs the PyTorch fp32 forward is a deliberate precision trade-off (PPR weights are
    # O(1)); validated against the fp32 reference in __main__.  The buffer should already be bf16
    # from setup; the cast below only runs if a raw fp32 buffer is passed in.
    mat = ppr_mat if ppr_mat.dtype == jnp.bfloat16 else ppr_mat.astype(jnp.bfloat16)
    pred = predictions.astype(jnp.bfloat16)

    # No runtime OOB check on TPU refs: clamp indices (torch would raise; documented divergence).
    idx32 = jnp.clip(idx.astype(jnp.int32), 0, n_nodes - 1)

    # Gather only the selected rows into a contiguous [B, N] slab (O(B*N), never O(N^2)).
    # TODO(synk): a fully in-kernel gather (mat in memory_space=pl.ANY + per-row async copies)
    # would save one HBM round-trip of the gathered slab; jnp.take keeps the kernel MXU-dense.
    mat_g = jnp.take(mat, idx32, axis=0)

    # ---- static tiling decisions ----
    tm = _pick_tm(n_sel)
    b_pad = _round_up(n_sel, tm)
    n_b = b_pad // tm

    vmem_cap = _vmem_capacity_bytes()
    vmem_limit = min((vmem_cap * 3) // 4, 96 * 1024 * 1024)  # ~48 MiB on v7x, 96 MiB on v5e/v6e
    budget = (vmem_limit * 4) // 5

    tk = force_block_k if force_block_k is not None else _pick_tk(tm, n_nodes, n_cls, budget)
    resident = tk >= n_nodes
    if resident:
        tk = n_nodes
    n_pad = _round_up(n_nodes, tk)
    n_k = n_pad // tk

    # Zero-pad the (cheap, post-gather) operands to tile multiples.
    if b_pad != n_sel or n_pad != n_nodes:
        mat_g = jnp.pad(mat_g, ((0, b_pad - n_sel), (0, n_pad - n_nodes)))
    if n_pad != n_nodes:
        pred = jnp.pad(pred, ((0, n_pad - n_nodes), (0, 0)))

    if resident:
        out = pl.pallas_call(
            _ppr_matmul_resident_kernel,
            out_shape=jax.ShapeDtypeStruct((b_pad, n_cls), jnp.float32),
            grid_spec=pltpu.PrefetchScalarGridSpec(
                num_scalar_prefetch=0,
                grid=(n_b,),
                in_specs=[
                    pl.BlockSpec((tm, n_pad), lambda i: (i, 0)),
                    pl.BlockSpec((n_pad, n_cls), lambda i: (0, 0)),  # constant index -> DMA'd once
                ],
                out_specs=pl.BlockSpec((tm, n_cls), lambda i: (i, 0)),
            ),
            compiler_params=pltpu.CompilerParams(
                dimension_semantics=("parallel",),
                vmem_limit_bytes=vmem_limit,
            ),
        )(mat_g, pred)
    else:
        out = pl.pallas_call(
            _ppr_matmul_tiled_kernel,
            out_shape=jax.ShapeDtypeStruct((b_pad, n_cls), jnp.float32),
            grid_spec=pltpu.PrefetchScalarGridSpec(
                num_scalar_prefetch=0,
                grid=(n_b, n_k),                     # batch axis first, reduction axis last
                in_specs=[
                    pl.BlockSpec((tm, tk), lambda i, k: (i, k)),
                    pl.BlockSpec((tk, n_cls), lambda i, k: (k, 0)),
                ],
                out_specs=pl.BlockSpec((tm, n_cls), lambda i, k: (i, 0)),
                scratch_shapes=[pltpu.VMEM((tm, n_cls), jnp.float32)],
            ),
            compiler_params=pltpu.CompilerParams(
                dimension_semantics=("parallel", "arbitrary"),
                vmem_limit_bytes=vmem_limit,
            ),
        )(mat_g, pred)

    return out[:n_sel, :]


if __name__ == "__main__":
    key = jax.random.PRNGKey(0)
    k_adj, k_pred, k_idx, k_idx2 = jax.random.split(key, 4)

    N_NODES = 256     # graph size
    N_CLASSES = 16    # prediction dim
    N_SEL = 8         # number of indexed nodes
    ALPHA = 0.1

    # Deterministic synthetic symmetric 0/1 adjacency (no self loops).
    upper = (jax.random.uniform(k_adj, (N_NODES, N_NODES)) < 0.05).astype(jnp.float32)
    upper = jnp.triu(upper, k=1)
    adj = upper + upper.T

    # __init__ : register_buffer('mat', ppr_mat); bf16 cast is done ONCE here, not per forward.
    ppr_mat_f32 = calc_ppr_exact_dense(adj, ALPHA).astype(jnp.float32)
    ppr_buffer = ppr_mat_f32.astype(jnp.bfloat16)

    predictions = jax.random.normal(k_pred, (N_NODES, N_CLASSES), dtype=jnp.float32)

    # --- test 1: small batch, resident (single K block, no-scratch) path ---
    idx = jax.random.permutation(k_idx, N_NODES)[:N_SEL].astype(jnp.int32)
    out = jax.block_until_ready(ppr_exact_forward(ppr_buffer, predictions, idx))
    ref = jnp.dot(ppr_mat_f32[idx], predictions)
    assert out.shape == (N_SEL, N_CLASSES)
    np.testing.assert_allclose(np.asarray(out), np.asarray(ref), rtol=5e-2, atol=3e-2)

    # --- test 2: larger batch + forced K tiling (batch blocking + fp32 accumulator path) ---
    N_SEL2 = 40
    idx2 = jax.random.randint(k_idx2, (N_SEL2,), 0, N_NODES, dtype=jnp.int32)
    out2 = jax.block_until_ready(
        ppr_exact_forward(ppr_buffer, predictions, idx2, force_block_k=128)
    )
    ref2 = jnp.dot(ppr_mat_f32[idx2], predictions)
    assert out2.shape == (N_SEL2, N_CLASSES)
    np.testing.assert_allclose(np.asarray(out2), np.asarray(ref2), rtol=5e-2, atol=3e-2)

    print("KERNEL_OK")
</pallas_src>

<mosaic_0001>
module attributes {stable_mosaic.version = 11 : i64} {
  func.func @_ppr_matmul_resident_kernel(%arg0: i32, %arg1: memref<8x256xbf16, #tpu.memory_space<vmem>>, %arg2: memref<256x16xbf16, #tpu.memory_space<vmem>>, %arg3: memref<8x16xf32, #tpu.memory_space<vmem>>) attributes {dimension_semantics = [#tpu.dimension_semantics<parallel>], iteration_bounds = array<i64: 1>, scalar_prefetch = 0 : i64, scratch_operands = 0 : i64, tpu.core_type = #tpu.core_type<tc>, window_params = [{transform_indices = @transform_0, window_bounds = array<i64: 8, 256>}, {pipeline_mode = #tpu.pipeline_mode<synchronous>, transform_indices = @transform_1, window_bounds = array<i64: 256, 16>}, {transform_indices = @transform_2, window_bounds = array<i64: 8, 16>}]} {
    %c0 = arith.constant 0 : index
    %c0_0 = arith.constant 0 : index
    %0 = vector.load %arg1[%c0, %c0_0] : memref<8x256xbf16, #tpu.memory_space<vmem>>, vector<8x256xbf16>
    %c0_1 = arith.constant 0 : index
    %c0_2 = arith.constant 0 : index
    %1 = vector.load %arg2[%c0_1, %c0_2] : memref<256x16xbf16, #tpu.memory_space<vmem>>, vector<256x16xbf16>
    %cst = arith.constant dense<0.000000e+00> : vector<8x16xf32>
    %2 = tpu.matmul %0, %1, %cst {dimension_numbers = #tpu.dot_dimension_numbers<[1], [0], [0], [1], [0, 0, 1, 1], [], []>} : vector<8x256xbf16>, vector<256x16xbf16>, vector<8x16xf32> -> vector<8x16xf32>
    %c0_3 = arith.constant 0 : index
    %c0_4 = arith.constant 0 : index
    %3 = vector.load %arg3[%c0_3, %c0_4] : memref<8x16xf32, #tpu.memory_space<vmem>>, vector<8x16xf32>
    tpu.vector_store %arg3[%c0_3, %c0_4], %2 {strides = array<i32>} : memref<8x16xf32, #tpu.memory_space<vmem>>, vector<8x16xf32>,
    return
  }
  func.func @transform_0(%arg0: i32) -> (i32, i32) {
    %c0_i32 = arith.constant 0 : i32
    %c0_i32_0 = arith.constant 0 : i32
    return %arg0, %c0_i32 : i32, i32
  }
  func.func @transform_1(%arg0: i32) -> (i32, i32) {
    %c0_i32 = arith.constant 0 : i32
    %c0_i32_0 = arith.constant 0 : i32
    %c0_i32_1 = arith.constant 0 : i32
    return %c0_i32, %c0_i32_0 : i32, i32
  }
  func.func @transform_2(%arg0: i32) -> (i32, i32) {
    %c0_i32 = arith.constant 0 : i32
    %c0_i32_0 = arith.constant 0 : i32
    return %arg0, %c0_i32 : i32, i32
  }
}

</mosaic_0001>

<llo_original>
// kernel: tpu_custom_call.1
$region0: #{tpu_custom_call.1}
  #allocation0 [shape = 'u32[]', space=smem, size = 0x4, offset = 0x4, fixed_abs, tag = 'smem constant byte address 0x4 - core index']
  #allocation1 [shape = 'u32[144,128]{1,0:T(1,128)}', space=vmem, size = 0x12000, scoped, tag = 'internal scratch']
  %s0 = inlined_call_operand.vmem [shape: bf16[8,256], index: 0, kind: input, shape index: {}]
  %s1 = inlined_call_operand.vmem [shape: bf16[256,16], index: 1, kind: input, shape index: {}]
  %s2 = inlined_call_operand.hbm [shape: f32[8,16], index: 2, kind: output, shape index: {}]
  %s3 = sld [smem:[#allocation0]]
  $region18: #{tpu_custom_call.1} parent=0
    _
  %s5 = ssub.s32 1, %s3
  %s6 = scalar_select 0, %s5, %s3
  $region1: #{tpu_custom_call.1} parent=0
    #allocation2 [shape = 'u8[4096]{0}', space=vmem, size = 0x1000, scoped, tag = 'output window, operand 0, single buffered']
    #allocation3 [shape = 's32[1]{0}', space=sflag, size = 0x4, scoped, tag = 'scoped memory for tpu_custom_call.1']
    %7 = vsyncpa [#allocation3], 0
    // Predicated region
    $region2: #{tpu_custom_call.1} parent=1 // pred_check
      _
    $region3: #{tpu_custom_call.1} parent=1 // pred_check_branch
      %9 = sbr.rel (0) target = $region5
    $region4: #{tpu_custom_call.1} parent=1 // pred_region
      _
    $region5: #{tpu_custom_call.1} parent=1 // pred_fallthru
      _
    // Predicated region
    $region6: #{tpu_custom_call.1} parent=1 // pred_check
      _
    $region7: #{tpu_custom_call.1} parent=1 // pred_check_branch
      %11 = sbr.rel (0) target = $region9
    $region8: #{tpu_custom_call.1} parent=1 // pred_region
      _
    $region9: #{tpu_custom_call.1} parent=1 // pred_fallthru
      _
    %v13 = vld [vmem:[%s0] sm:$0xff]
    %v14 = vld [vmem:[%s1] sm:$0xf]
    %v15 = vld [vmem:[%s1 + $0x4] sm:$0xf]
    %v16 = vld [vmem:[%s1 + $0x8] sm:$0xf]
    %v17 = vld [vmem:[%s1 + $0xc] sm:$0xf]
    %v18 = vld [vmem:[%s1 + $0x10] sm:$0xf]
    %v19 = vld [vmem:[%s1 + $0x14] sm:$0xf]
    %v20 = vld [vmem:[%s1 + $0x18] sm:$0xf]
    %v21 = vld [vmem:[%s1 + $0x1c] sm:$0xf]
    %v22 = vld [vmem:[%s1 + $0x20] sm:$0xf]
    %v23 = vld [vmem:[%s1 + $0x24] sm:$0xf]
    %v24 = vld [vmem:[%s1 + $0x28] sm:$0xf]
    %v25 = vld [vmem:[%s1 + $0x2c] sm:$0xf]
    %v26 = vld [vmem:[%s1 + $0x30] sm:$0xf]
    %v27 = vld [vmem:[%s1 + $0x34] sm:$0xf]
    %v28 = vld [vmem:[%s1 + $0x38] sm:$0xf]
    %v29 = vld [vmem:[%s1 + $0x3c] sm:$0xf]
    %v30 = vld [vmem:[%s1 + $0x40] sm:$0xf]
    %v31 = vld [vmem:[%s1 + $0x44] sm:$0xf]
    %v32 = vld [vmem:[%s1 + $0x48] sm:$0xf]
    %v33 = vld [vmem:[%s1 + $0x4c] sm:$0xf]
    %v34 = vld [vmem:[%s1 + $0x50] sm:$0xf]
    %v35 = vld [vmem:[%s1 + $0x54] sm:$0xf]
    %v36 = vld [vmem:[%s1 + $0x58] sm:$0xf]
    %v37 = vld [vmem:[%s1 + $0x5c] sm:$0xf]
    %v38 = vld [vmem:[%s1 + $0x60] sm:$0xf]
    %v39 = vld [vmem:[%s1 + $0x64] sm:$0xf]
    %v40 = vld [vmem:[%s1 + $0x68] sm:$0xf]
    %v41 = vld [vmem:[%s1 + $0x6c] sm:$0xf]
    %v42 = vld [vmem:[%s1 + $0x70] sm:$0xf]
    %v43 = vld [vmem:[%s1 + $0x74] sm:$0xf]
    %v44 = vld [vmem:[%s1 + $0x78] sm:$0xf]
    %v45 = vld [vmem:[%s1 + $0x7c] sm:$0xf]
    %v47 = vunpack.c.l.b16 %v13
    %v48 = vunpack.c.h.b16 %v13
    %v49 = vpack.c.b16 %v47, %v47
    %v50 = vpack.c.b16 %v48, %v48
    %v85 = vunpack.c.l.b16 %v14
    %v86 = vunpack.c.l.b16 %v15
    %v87 = vunpack.c.l.b16 %v16
    %v88 = vunpack.c.l.b16 %v17
    %v89 = vunpack.c.l.b16 %v18
    %v90 = vunpack.c.l.b16 %v19
    %v91 = vunpack.c.l.b16 %v20
    %v92 = vunpack.c.l.b16 %v21
    %v93 = vunpack.c.l.b16 %v22
    %v94 = vunpack.c.l.b16 %v23
    %v95 = vunpack.c.l.b16 %v24
    %v96 = vunpack.c.l.b16 %v25
    %v97 = vunpack.c.l.b16 %v26
    %v98 = vunpack.c.l.b16 %v27
    %v99 = vunpack.c.l.b16 %v28
    %v100 = vunpack.c.l.b16 %v29
    %v101 = vunpack.c.l.b16 %v30
    %v102 = vunpack.c.l.b16 %v31
    %v103 = vunpack.c.l.b16 %v32
    %v104 = vunpack.c.l.b16 %v33
    %v105 = vunpack.c.l.b16 %v34
    %v106 = vunpack.c.l.b16 %v35
    %v107 = vunpack.c.l.b16 %v36
    %v108 = vunpack.c.l.b16 %v37
    %v109 = vunpack.c.l.b16 %v38
    %v110 = vunpack.c.l.b16 %v39
    %v111 = vunpack.c.l.b16 %v40
    %v112 = vunpack.c.l.b16 %v41
    %v113 = vunpack.c.l.b16 %v42
    %v114 = vunpack.c.l.b16 %v43
    %v115 = vunpack.c.l.b16 %v44
    %v116 = vunpack.c.l.b16 %v45
    %v117 = vpack.c.b16 %v86, %v85
    %v118 = vpack.c.b16 %v88, %v87
    %v119 = vpack.c.b16 %v90, %v89
    %v120 = vpack.c.b16 %v92, %v91
    %v121 = vpack.c.b16 %v94, %v93
    %v122 = vpack.c.b16 %v96, %v95
    %v123 = vpack.c.b16 %v98, %v97
    %v124 = vpack.c.b16 %v100, %v99
    %v125 = vpack.c.b16 %v102, %v101
    %v126 = vpack.c.b16 %v104, %v103
    %v127 = vpack.c.b16 %v106, %v105
    %v128 = vpack.c.b16 %v108, %v107
    %v129 = vpack.c.b16 %v110, %v109
    %v130 = vpack.c.b16 %v112, %v111
    %v131 = vpack.c.b16 %v114, %v113
    %v132 = vpack.c.b16 %v116, %v115
    %149 = vmatprep.subr.bf16.mxu0 0
    %150 = vmatpush1.bf16.msra.mxu0 %v117
    %151 = vmatprep.subr.bf16.mxu0 0
    %152 = vmatpush1.bf16.msra.mxu0 %v118
    %153 = vmatprep.subr.bf16.mxu0 0
    %154 = vmatpush1.bf16.msra.mxu0 %v119
    %155 = vmatprep.subr.bf16.mxu0 0
    %156 = vmatpush1.bf16.msra.mxu0 %v120
    %157 = vmatprep.subr.bf16.mxu0 0
    %158 = vmatpush1.bf16.msra.mxu0 %v121
    %159 = vmatprep.subr.bf16.mxu0 0
    %160 = vmatpush1.bf16.msra.mxu0 %v122
    %161 = vmatprep.subr.bf16.mxu0 0
    %162 = vmatpush1.bf16.msra.mxu0 %v123
    %163 = vmatprep.subr.bf16.mxu0 0
    %164 = vmatpush1.bf16.msra.mxu0 %v124
    %165 = vmatprep.subr.bf16.mxu0 0
    %166 = vmatpush1.bf16.msra.mxu0 %v125
    %167 = vmatprep.subr.bf16.mxu0 0
    %168 = vmatpush1.bf16.msra.mxu0 %v126
    %169 = vmatprep.subr.bf16.mxu0 0
    %170 = vmatpush1.bf16.msra.mxu0 %v127
    %171 = vmatprep.subr.bf16.mxu0 0
    %172 = vmatpush1.bf16.msra.mxu0 %v128
    %173 = vmatprep.subr.bf16.mxu0 0
    %174 = vmatpush1.bf16.msra.mxu0 %v129
    %175 = vmatprep.subr.bf16.mxu0 0
    %176 = vmatpush1.bf16.msra.mxu0 %v130
    %177 = vmatprep.subr.bf16.mxu0 0
    %178 = vmatpush1.bf16.msra.mxu0 %v131
    %179 = vmatprep.subr.bf16.mxu0 0
    %180 = vmatpush1.bf16.msra.mxu0 %v132
    %181 = vmatprep.mubr.bf16.mxu0 %v50
    %182 = vmatmul.mubr.bf16.gmra.mrb[0].mxu0 %v49
    %v183 = vpop.f32.mrb[0].mxu0
    %v184 = vadd.f32 0.0, %v183
    %v185 = vpop.f32.mrb[0].mxu0
    %v186 = vpop.f32.mrb[0].mxu0
    %v187 = vpop.f32.mrb[0].mxu0
    %188 = vdwg.mxu0
    %vm189 = vcmask 130048
    %190 = vst.msk [vmem:[#allocation2] sm:$0xff] %vm189, %v184
    // Predicated region
    $region10: #{tpu_custom_call.1} parent=1 // pred_check
      _
    $region11: #{tpu_custom_call.1} parent=1 // pred_check_branch
      %192 = sbr.rel (0) target = $region13
    $region12: #{tpu_custom_call.1} parent=1 // pred_region
      %s194 = ssub.s32 128, 128
      %195 = vsyncadd [#allocation3], %s194
      %s197 = sshll.u32 [#allocation2], 4
      %s198 = int_to_ptr.vmem [resolvable:$true] %s197
      %200 = dma.vmem_to_hbm [thread:$0]  %s198, 128, %s2, [#allocation3]
    $region13: #{tpu_custom_call.1} parent=1 // pred_fallthru
      _
    // Predicated region
    $region14: #{tpu_custom_call.1} parent=1 // pred_check
      _
    $region15: #{tpu_custom_call.1} parent=1 // pred_check_branch
      %202 = sbr.rel (0) target = $region17
    $region16: #{tpu_custom_call.1} parent=1 // pred_region
      %203 = dma.done [#allocation3], 128
    $region17: #{tpu_custom_call.1} parent=1 // pred_fallthru
      _
    %204 = vsyncpa [#allocation3], 1

</llo_original>
